<compile_context>
chip_gen: v7x
topology: tpu7x:2x2x1
jax: 0.10.0
libtpu: 0.0.40
codegen_flags: <defaults>
</compile_context>

<pallas_src>
import functools
import math

import jax
import jax.numpy as jnp
from jax.experimental import pallas as pl
from jax.experimental.pallas import tpu as pltpu


def _round_up(x, m):
    return ((x + m - 1) // m) * m


def _vmem_capacity_bytes():
    """Physical VMEM of the current generation (conservative fallback)."""
    try:
        return int(pltpu.get_tpu_info().vmem_capacity_bytes)
    except Exception:
        return 64 << 20          # v7x per-TC size; safe lower bound everywhere


def _pick_hidden_tile(hidden, th_req):
    """Largest divisor of `hidden` <= th_req, preferring lane-aligned (x128)
    tiles so the gated intermediates stay on lane boundaries."""
    th_req = max(1, min(th_req, hidden))
    best_any, best_lane = 1, 0
    for d in range(1, th_req + 1):
        if hidden % d == 0:
            best_any = d
            if d % 128 == 0:
                best_lane = d
    return best_lane if best_lane else best_any


# --------------------------------------------------------------------------
# Kernel bodies
# --------------------------------------------------------------------------
def _glu_kernel_acc(x_ref, w1_ref, w3_ref, w2_ref, o_ref, acc_ref, *, gate_dtype):
    # x_ref:  (tm, dim)      token tile (resident across the hidden axis)
    # w1_ref: (dim, th)      up-projection tile for hidden tile k
    # w3_ref: (dim, th)      gate-projection tile for hidden tile k
    # w2_ref: (th, dim)      down-projection tile for hidden tile k
    # o_ref:  (tm, dim)      output tile (resident across the hidden axis)
    # acc_ref:(tm, dim) f32  accumulator over hidden tiles
    k = pl.program_id(1)

    @pl.when(k == 0)
    def _():
        acc_ref[...] = jnp.zeros_like(acc_ref)

    x = x_ref[...]
    h1 = jnp.dot(x, w1_ref[...], preferred_element_type=jnp.float32).astype(gate_dtype)
    h3 = jnp.dot(x, w3_ref[...], preferred_element_type=jnp.float32).astype(gate_dtype)
    gated = (h1 * jax.nn.sigmoid(h1)) * h3          # silu(h1) * h3
    acc_ref[...] += jnp.dot(gated.astype(w2_ref.dtype), w2_ref[...],
                            preferred_element_type=jnp.float32)

    @pl.when(k == pl.num_programs(1) - 1)
    def _():
        o_ref[...] = acc_ref[...].astype(o_ref.dtype)


def _glu_kernel_single(x_ref, w1_ref, w3_ref, w2_ref, o_ref, *, gate_dtype):
    # Single hidden tile: no accumulator scratch / phase gating needed.
    x = x_ref[...]
    h1 = jnp.dot(x, w1_ref[...], preferred_element_type=jnp.float32).astype(gate_dtype)
    h3 = jnp.dot(x, w3_ref[...], preferred_element_type=jnp.float32).astype(gate_dtype)
    gated = (h1 * jax.nn.sigmoid(h1)) * h3
    o_ref[...] = jnp.dot(gated.astype(w2_ref.dtype), w2_ref[...],
                         preferred_element_type=jnp.float32).astype(o_ref.dtype)


# --------------------------------------------------------------------------
# Wrapper
# --------------------------------------------------------------------------
def glu_forward(x, w1, w3, w2, *, tm=512, th=1024,
                compute_dtype="auto", gate_dtype=None, out_dtype=None):
    """x: [M, dim]; w1, w3: [dim, hidden]; w2: [hidden, dim] -> [M, dim]."""
    M, dim = x.shape
    hidden = w1.shape[1]
    assert w1.shape == (dim, hidden) and w3.shape == (dim, hidden)
    assert w2.shape == (hidden, dim)

    out_dtype = jnp.dtype(out_dtype if out_dtype is not None else x.dtype)

    if compute_dtype is None:
        compute_dtype = x.dtype
    elif isinstance(compute_dtype, str) and compute_dtype == "auto":
        # fp32 matmuls run the MXU in multi-pass mode; bf16 inputs (with fp32
        # accumulation inside the kernel) get the full-rate MXU path and halve
        # the weight HBM traffic.
        compute_dtype = jnp.bfloat16 if x.dtype == jnp.float32 else x.dtype
    compute_dtype = jnp.dtype(compute_dtype)

    # NOTE: in a real model the weights would be stored pre-cast; these casts
    # happen once in the wrapper, outside the kernel's hot loop.
    if x.dtype != compute_dtype:
        x = x.astype(compute_dtype)
    w1 = w1.astype(compute_dtype)
    w3 = w3.astype(compute_dtype)
    w2 = w2.astype(compute_dtype)

    # Gate math in the compute dtype (bf16 VPU/EUP on v6e/v7x).
    # TODO(synk): force float32 gate math on v5e (no bf16 VPU/EUP there).
    gate_dtype = jnp.dtype(gate_dtype if gate_dtype is not None else compute_dtype)

    xb = compute_dtype.itemsize
    ob = out_dtype.itemsize
    gb = gate_dtype.itemsize

    # --- token tile ---------------------------------------------------------
    tm = max(16, min(tm, _round_up(M, 16)))          # multiple of 16 (bf16 pack)
    # v7x has 2 TensorCores: make sure the parallel axis has >= 2 blocks.
    if M > 16 and _round_up(M, tm) // tm < 2:
        tm = max(16, _round_up(-(-M // 2), 16))

    # --- hidden tile + VMEM fit ----------------------------------------------
    vmem_cap = _vmem_capacity_bytes()
    budget = max(vmem_cap - (8 << 20), 24 << 20)     # leave compiler headroom

    th = _pick_hidden_tile(hidden, th)

    def _need(tm_, th_):
        kt_ = hidden // th_
        return (2 * tm_ * dim * xb                   # x tiles (double buffered)
                + 2 * 2 * dim * th_ * xb             # w1 + w3 tiles
                + 2 * th_ * dim * xb                 # w2 tiles
                + 2 * tm_ * dim * ob                 # out tiles
                + (tm_ * dim * 4 if kt_ > 1 else 0)  # fp32 accumulator
                + 3 * tm_ * th_ * gb)                # h1 / h3 / gated

    while _need(tm, th) > budget:
        if th > 256:
            th = _pick_hidden_tile(hidden, th // 2)
        elif tm > 128:
            tm = max(128, tm // 2)
        else:
            break
    kt = hidden // th

    M_pad = _round_up(M, tm)
    if M_pad != M:
        x = jnp.pad(x, ((0, M_pad - M), (0, 0)))

    grid = (M_pad // tm, kt)   # (parallel token tiles, arbitrary hidden reduction)

    vmem_limit = int(min(max(_need(tm, th) + (16 << 20), 32 << 20),
                         max(vmem_cap - (4 << 20), 32 << 20)))

    cost = pl.CostEstimate(
        flops=int(6 * M_pad * dim * hidden),
        transcendentals=int(M_pad * hidden),
        bytes_accessed=int(M_pad * dim * (xb + ob)
                           + (w1.size + w3.size + w2.size) * xb * (M_pad // tm)),
    )

    if kt == 1:
        kernel = functools.partial(_glu_kernel_single, gate_dtype=gate_dtype)
        scratch = []
    else:
        kernel = functools.partial(_glu_kernel_acc, gate_dtype=gate_dtype)
        scratch = [pltpu.VMEM((tm, dim), jnp.float32)]

    out = pl.pallas_call(
        kernel,
        out_shape=jax.ShapeDtypeStruct((M_pad, dim), out_dtype),
        grid_spec=pltpu.PrefetchScalarGridSpec(
            num_scalar_prefetch=0,
            grid=grid,
            in_specs=[
                pl.BlockSpec((tm, dim), lambda i, k: (i, 0)),    # x tile
                pl.BlockSpec((dim, th), lambda i, k: (0, k)),    # w1 tile
                pl.BlockSpec((dim, th), lambda i, k: (0, k)),    # w3 tile
                pl.BlockSpec((th, dim), lambda i, k: (k, 0)),    # w2 tile
            ],
            out_specs=pl.BlockSpec((tm, dim), lambda i, k: (i, 0)),
            scratch_shapes=scratch,
        ),
        compiler_params=pltpu.CompilerParams(
            dimension_semantics=("parallel", "arbitrary"),
            vmem_limit_bytes=vmem_limit,
        ),
        cost_estimate=cost,
    )(x, w1, w3, w2)

    return out[:M] if M_pad != M else out


# --------------------------------------------------------------------------
# Reference + init helpers
# --------------------------------------------------------------------------
def _init_linear_weight(key, in_features, out_features, dtype=jnp.float32):
    # Matches nn.Linear default init: U(-1/sqrt(in), 1/sqrt(in)).
    # Returned pre-transposed as [in, out] so forward is x @ W.
    bound = 1.0 / math.sqrt(in_features)
    return jax.random.uniform(key, (in_features, out_features),
                              minval=-bound, maxval=bound, dtype=dtype)


def glu_reference(x, w1, w3, w2):
    h1 = x @ w1
    h3 = x @ w3
    return (h1 * jax.nn.sigmoid(h1) * h3) @ w2


if __name__ == "__main__":
    # TODO(synk): nn.Dropout path is identity here (module default dropout=None).
    # --- small config matching the module defaults (silu, bias=False) -------
    batch, seq, dim, hidden = 2, 8, 32, 64
    key = jax.random.PRNGKey(0)
    kx, k1, k2, k3 = jax.random.split(key, 4)

    x = jax.random.normal(kx, (batch, seq, dim), dtype=jnp.float32)
    w1 = _init_linear_weight(k1, dim, hidden)     # [dim, hidden]
    w3 = _init_linear_weight(k3, dim, hidden)     # [dim, hidden]
    w2 = _init_linear_weight(k2, hidden, dim)     # [hidden, dim]

    x2d = x.reshape(batch * seq, dim)
    out = jax.block_until_ready(
        glu_forward(x2d, w1, w3, w2, compute_dtype=jnp.float32))
    ref = glu_reference(x2d, w1, w3, w2)
    assert jnp.allclose(out, ref, atol=1e-5, rtol=1e-5), "small-config mismatch"

    # --- bf16 MXU path + hidden-tiled reduction + ragged-M padding ----------
    M2, dim2, hidden2 = 200, 256, 512
    k5, k6, k7, k8 = jax.random.split(jax.random.PRNGKey(1), 4)
    x2 = jax.random.normal(k5, (M2, dim2), dtype=jnp.float32)
    w1b = _init_linear_weight(k6, dim2, hidden2)
    w3b = _init_linear_weight(k8, dim2, hidden2)
    w2b = _init_linear_weight(k7, hidden2, dim2)

    out2 = jax.block_until_ready(
        glu_forward(x2, w1b, w3b, w2b, tm=512, th=256, compute_dtype="auto"))
    ref2 = glu_reference(x2, w1b, w3b, w2b)
    rel_err = jnp.max(jnp.abs(out2 - ref2)) / (jnp.max(jnp.abs(ref2)) + 1e-6)
    assert rel_err < 3e-2, f"tiled bf16-config mismatch (rel err {rel_err})"

    print("KERNEL_OK")
</pallas_src>

<mosaic_0001>
module attributes {stable_mosaic.version = 11 : i64} {
  func.func @_glu_kernel_single(%arg0: i32, %arg1: i32, %arg2: memref<16x32xf32, #tpu.memory_space<vmem>>, %arg3: memref<32x64xf32, #tpu.memory_space<vmem>>, %arg4: memref<32x64xf32, #tpu.memory_space<vmem>>, %arg5: memref<64x32xf32, #tpu.memory_space<vmem>>, %arg6: memref<16x32xf32, #tpu.memory_space<vmem>>) attributes {dimension_semantics = [#tpu.dimension_semantics<parallel>, #tpu.dimension_semantics<arbitrary>], iteration_bounds = array<i64: 1, 1>, scalar_prefetch = 0 : i64, scratch_operands = 0 : i64, tpu.core_type = #tpu.core_type<tc>, window_params = [{transform_indices = @transform_0, window_bounds = array<i64: 16, 32>}, {transform_indices = @transform_1, window_bounds = array<i64: 32, 64>}, {transform_indices = @transform_2, window_bounds = array<i64: 32, 64>}, {transform_indices = @transform_3, window_bounds = array<i64: 64, 32>}, {transform_indices = @transform_4, window_bounds = array<i64: 16, 32>}]} {
    %c0 = arith.constant 0 : index
    %c0_0 = arith.constant 0 : index
    %0 = vector.load %arg2[%c0, %c0_0] : memref<16x32xf32, #tpu.memory_space<vmem>>, vector<16x32xf32>
    %c0_1 = arith.constant 0 : index
    %c0_2 = arith.constant 0 : index
    %1 = vector.load %arg3[%c0_1, %c0_2] : memref<32x64xf32, #tpu.memory_space<vmem>>, vector<32x64xf32>
    %cst = arith.constant dense<0.000000e+00> : vector<16x64xf32>
    %2 = tpu.matmul %0, %1, %cst {dimension_numbers = #tpu.dot_dimension_numbers<[1], [0], [0], [1], [0, 0, 1, 1], [], []>} : vector<16x32xf32>, vector<32x64xf32>, vector<16x64xf32> -> vector<16x64xf32>
    %c0_3 = arith.constant 0 : index
    %c0_4 = arith.constant 0 : index
    %3 = vector.load %arg4[%c0_3, %c0_4] : memref<32x64xf32, #tpu.memory_space<vmem>>, vector<32x64xf32>
    %cst_5 = arith.constant dense<0.000000e+00> : vector<16x64xf32>
    %4 = tpu.matmul %0, %3, %cst_5 {dimension_numbers = #tpu.dot_dimension_numbers<[1], [0], [0], [1], [0, 0, 1, 1], [], []>} : vector<16x32xf32>, vector<32x64xf32>, vector<16x64xf32> -> vector<16x64xf32>
    %5 = arith.negf %2 : vector<16x64xf32>
    %6 = math.exp %5 : vector<16x64xf32>
    %cst_6 = arith.constant 1.000000e+00 : f32
    %7 = vector.broadcast %cst_6 : f32 to vector<16x64xf32>
    %8 = arith.addf %7, %6 : vector<16x64xf32>
    %9 = arith.divf %7, %8 : vector<16x64xf32>
    %10 = arith.mulf %2, %9 : vector<16x64xf32>
    %11 = arith.mulf %10, %4 : vector<16x64xf32>
    %c0_7 = arith.constant 0 : index
    %c0_8 = arith.constant 0 : index
    %12 = vector.load %arg5[%c0_7, %c0_8] : memref<64x32xf32, #tpu.memory_space<vmem>>, vector<64x32xf32>
    %cst_9 = arith.constant dense<0.000000e+00> : vector<16x32xf32>
    %13 = tpu.matmul %11, %12, %cst_9 {dimension_numbers = #tpu.dot_dimension_numbers<[1], [0], [0], [1], [0, 0, 1, 1], [], []>} : vector<16x64xf32>, vector<64x32xf32>, vector<16x32xf32> -> vector<16x32xf32>
    %c0_10 = arith.constant 0 : index
    %c0_11 = arith.constant 0 : index
    %14 = vector.load %arg6[%c0_10, %c0_11] : memref<16x32xf32, #tpu.memory_space<vmem>>, vector<16x32xf32>
    tpu.vector_store %arg6[%c0_10, %c0_11], %13 {strides = array<i32>} : memref<16x32xf32, #tpu.memory_space<vmem>>, vector<16x32xf32>,
    return
  }
  func.func @transform_0(%arg0: i32, %arg1: i32) -> (i32, i32) {
    %c0_i32 = arith.constant 0 : i32
    %c0_i32_0 = arith.constant 0 : i32
    return %arg0, %c0_i32 : i32, i32
  }
  func.func @transform_1(%arg0: i32, %arg1: i32) -> (i32, i32) {
    %c0_i32 = arith.constant 0 : i32
    %c0_i32_0 = arith.constant 0 : i32
    return %c0_i32, %arg1 : i32, i32
  }
  func.func @transform_2(%arg0: i32, %arg1: i32) -> (i32, i32) {
    %c0_i32 = arith.constant 0 : i32
    %c0_i32_0 = arith.constant 0 : i32
    return %c0_i32, %arg1 : i32, i32
  }
  func.func @transform_3(%arg0: i32, %arg1: i32) -> (i32, i32) {
    %c0_i32 = arith.constant 0 : i32
    %c0_i32_0 = arith.constant 0 : i32
    return %arg1, %c0_i32 : i32, i32
  }
  func.func @transform_4(%arg0: i32, %arg1: i32) -> (i32, i32) {
    %c0_i32 = arith.constant 0 : i32
    %c0_i32_0 = arith.constant 0 : i32
    return %arg0, %c0_i32 : i32, i32
  }
}

</mosaic_0001>

<llo_original>
// kernel: tpu_custom_call.1
$region0: #{tpu_custom_call.1}
  #allocation0 [shape = 'u32[]', space=smem, size = 0x4, offset = 0x4, fixed_abs, tag = 'smem constant byte address 0x4 - core index']
  #allocation1 [shape = 'u32[144,128]{1,0:T(1,128)}', space=vmem, size = 0x12000, scoped, tag = 'internal scratch']
  %s0 = inlined_call_operand.vmem [shape: f32[16,32], index: 0, kind: input, shape index: {}]
  %s1 = inlined_call_operand.vmem [shape: f32[32,64], index: 1, kind: input, shape index: {}]
  %s2 = inlined_call_operand.vmem [shape: f32[32,64], index: 2, kind: input, shape index: {}]
  %s3 = inlined_call_operand.vmem [shape: f32[64,32], index: 3, kind: input, shape index: {}]
  %s4 = inlined_call_operand.hbm [shape: f32[16,32], index: 4, kind: output, shape index: {}]
  %s5 = sld [smem:[#allocation0]]
  $region26: #{tpu_custom_call.1} parent=0
    _
  %s7 = ssub.s32 1, %s5
  %s8 = scalar_select 0, %s7, %s5
  $region1: #{tpu_custom_call.1} parent=0
    #allocation2 [shape = 'u8[8192]{0}', space=vmem, size = 0x2000, scoped, tag = 'output window, operand 0, single buffered']
    #allocation3 [shape = 's32[1]{0}', space=sflag, size = 0x4, scoped, tag = 'scoped memory for tpu_custom_call.1']
    %9 = vsyncpa [#allocation3], 0
    // Predicated region
    $region2: #{tpu_custom_call.1} parent=1 // pred_check
      _
    $region3: #{tpu_custom_call.1} parent=1 // pred_check_branch
      %11 = sbr.rel (0) target = $region5
    $region4: #{tpu_custom_call.1} parent=1 // pred_region
      _
    $region5: #{tpu_custom_call.1} parent=1 // pred_fallthru
      _
    // Predicated region
    $region6: #{tpu_custom_call.1} parent=1 // pred_check
      _
    $region7: #{tpu_custom_call.1} parent=1 // pred_check_branch
      %13 = sbr.rel (0) target = $region9
    $region8: #{tpu_custom_call.1} parent=1 // pred_region
      _
    $region9: #{tpu_custom_call.1} parent=1 // pred_fallthru
      _
    // Predicated region
    $region10: #{tpu_custom_call.1} parent=1 // pred_check
      _
    $region11: #{tpu_custom_call.1} parent=1 // pred_check_branch
      %15 = sbr.rel (0) target = $region13
    $region12: #{tpu_custom_call.1} parent=1 // pred_region
      _
    $region13: #{tpu_custom_call.1} parent=1 // pred_fallthru
      _
    // Predicated region
    $region14: #{tpu_custom_call.1} parent=1 // pred_check
      _
    $region15: #{tpu_custom_call.1} parent=1 // pred_check_branch
      %17 = sbr.rel (0) target = $region17
    $region16: #{tpu_custom_call.1} parent=1 // pred_region
      _
    $region17: #{tpu_custom_call.1} parent=1 // pred_fallthru
      _
    %v18 = vld [vmem:[%s0] sm:$0xff]
    %v19 = vld [vmem:[%s0 + $0x8] sm:$0xff]
    %v20 = vld [vmem:[%s1] sm:$0xff]
    %v21 = vld [vmem:[%s1 + $0x8] sm:$0xff]
    %v22 = vld [vmem:[%s1 + $0x10] sm:$0xff]
    %v23 = vld [vmem:[%s1 + $0x18] sm:$0xff]
    %vm24 = vcmask 261120
    %v26 = vsel %vm24, %v18, 0
    %v29 = vsel %vm24, %v19, 0
    %31 = vmatprep.subr.mxu0 0.0
    %32 = vmatpush1.msra.mxu0 %v20
    %33 = vmatprep.subr.mxu0 0.0
    %34 = vmatpush1.msra.mxu0 %v21
    %35 = vmatprep.subr.mxu0 0.0
    %36 = vmatpush1.msra.mxu0 %v22
    %37 = vmatprep.subr.mxu0 0.0
    %38 = vmatpush1.msra.mxu0 %v23
    %39 = vmatprep.subr.mxu0 0.0
    %40 = vmatpush1.msra.mxu0 0.0
    %41 = vmatprep.subr.mxu0 0.0
    %42 = vmatpush1.msra.mxu0 0.0
    %43 = vmatprep.subr.mxu0 0.0
    %44 = vmatpush1.msra.mxu0 0.0
    %45 = vmatprep.subr.mxu0 0.0
    %46 = vmatpush1.msra.mxu0 0.0
    %47 = vmatprep.subr.mxu0 0.0
    %48 = vmatpush1.msra.mxu0 0.0
    %49 = vmatprep.subr.mxu0 0.0
    %50 = vmatpush1.msra.mxu0 0.0
    %51 = vmatprep.subr.mxu0 0.0
    %52 = vmatpush1.msra.mxu0 0.0
    %53 = vmatprep.subr.mxu0 0.0
    %54 = vmatpush1.msra.mxu0 0.0
    %55 = vmatprep.subr.mxu0 0.0
    %56 = vmatpush1.msra.mxu0 0.0
    %57 = vmatprep.subr.mxu0 0.0
    %58 = vmatpush1.msra.mxu0 0.0
    %59 = vmatprep.subr.mxu0 0.0
    %60 = vmatpush1.msra.mxu0 0.0
    %61 = vmatprep.subr.mxu0 0.0
    %62 = vmatpush1.msra.mxu0 0.0
    %63 = vmatprep.subr.mxu0 0.0
    %64 = vmatpush1.msra.mxu0 0.0
    %65 = vmatprep.subr.mxu0 0.0
    %66 = vmatpush1.msra.mxu0 0.0
    %67 = vmatprep.subr.mxu0 0.0
    %68 = vmatpush1.msra.mxu0 0.0
    %69 = vmatprep.subr.mxu0 0.0
    %70 = vmatpush1.msra.mxu0 0.0
    %71 = vmatprep.subr.mxu0 0.0
    %72 = vmatpush1.msra.mxu0 0.0
    %73 = vmatprep.subr.mxu0 0.0
    %74 = vmatpush1.msra.mxu0 0.0
    %75 = vmatprep.subr.mxu0 0.0
    %76 = vmatpush1.msra.mxu0 0.0
    %77 = vmatprep.subr.mxu0 0.0
    %78 = vmatpush1.msra.mxu0 0.0
    %79 = vmatprep.subr.mxu0 0.0
    %80 = vmatpush1.msra.mxu0 0.0
    %81 = vmatprep.subr.mxu0 0.0
    %82 = vmatpush1.msra.mxu0 0.0
    %83 = vmatprep.subr.mxu0 0.0
    %84 = vmatpush1.msra.mxu0 0.0
    %85 = vmatprep.subr.mxu0 0.0
    %86 = vmatpush1.msra.mxu0 0.0
    %87 = vmatprep.subr.mxu0 0.0
    %88 = vmatpush1.msra.mxu0 0.0
    %89 = vmatprep.subr.mxu0 0.0
    %90 = vmatpush1.msra.mxu0 0.0
    %91 = vmatprep.subr.mxu0 0.0
    %92 = vmatpush1.msra.mxu0 0.0
    %93 = vmatprep.subr.mxu0 0.0
    %94 = vmatpush1.msra.mxu0 0.0
    %95 = vmatprep.mubr.f32.mxu0 0.0
    %96 = vmatmul.mubr.f32.gmra.mrb[0].mxu0 %v26
    %v97 = vpop.f32.mrb[0].mxu0
    %v98 = vadd.f32 0.0, %v97
    %v99 = vpop.f32.mrb[0].mxu0
    %100 = vmatprep.mubr.f32.mxu0 0.0
    %101 = vmatmul.mubr.f32.gmra.mrb[0].mxu0 %v29
    %v102 = vpop.f32.mrb[0].mxu0
    %v103 = vadd.f32 0.0, %v102
    %v104 = vpop.f32.mrb[0].mxu0
    %105 = vdwg.mxu0
    %v106 = vld [vmem:[%s2] sm:$0xff]
    %v107 = vld [vmem:[%s2 + $0x8] sm:$0xff]
    %v108 = vld [vmem:[%s2 + $0x10] sm:$0xff]
    %v109 = vld [vmem:[%s2 + $0x18] sm:$0xff]
    %110 = vmatprep.subr.mxu0 0.0
    %111 = vmatpush1.msra.mxu0 %v106
    %112 = vmatprep.subr.mxu0 0.0
    %113 = vmatpush1.msra.mxu0 %v107
    %114 = vmatprep.subr.mxu0 0.0
    %115 = vmatpush1.msra.mxu0 %v108
    %116 = vmatprep.subr.mxu0 0.0
    %117 = vmatpush1.msra.mxu0 %v109
    %118 = vmatprep.subr.mxu0 0.0
    %119 = vmatpush1.msra.mxu0 0.0
    %120 = vmatprep.subr.mxu0 0.0
    %121 = vmatpush1.msra.mxu0 0.0
    %122 = vmatprep.subr.mxu0 0.0
    %123 = vmatpush1.msra.mxu0 0.0
    %124 = vmatprep.subr.mxu0 0.0
    %125 = vmatpush1.msra.mxu0 0.0
    %126 = vmatprep.subr.mxu0 0.0
    %127 = vmatpush1.msra.mxu0 0.0
    %128 = vmatprep.subr.mxu0 0.0
    %129 = vmatpush1.msra.mxu0 0.0
    %130 = vmatprep.subr.mxu0 0.0
    %131 = vmatpush1.msra.mxu0 0.0
    %132 = vmatprep.subr.mxu0 0.0
    %133 = vmatpush1.msra.mxu0 0.0
    %134 = vmatprep.subr.mxu0 0.0
    %135 = vmatpush1.msra.mxu0 0.0
    %136 = vmatprep.subr.mxu0 0.0
    %137 = vmatpush1.msra.mxu0 0.0
    %138 = vmatprep.subr.mxu0 0.0
    %139 = vmatpush1.msra.mxu0 0.0
    %140 = vmatprep.subr.mxu0 0.0
    %141 = vmatpush1.msra.mxu0 0.0
    %142 = vmatprep.subr.mxu0 0.0
    %143 = vmatpush1.msra.mxu0 0.0
    %144 = vmatprep.subr.mxu0 0.0
    %145 = vmatpush1.msra.mxu0 0.0
    %146 = vmatprep.subr.mxu0 0.0
    %147 = vmatpush1.msra.mxu0 0.0
    %148 = vmatprep.subr.mxu0 0.0
    %149 = vmatpush1.msra.mxu0 0.0
    %150 = vmatprep.subr.mxu0 0.0
    %151 = vmatpush1.msra.mxu0 0.0
    %152 = vmatprep.subr.mxu0 0.0
    %153 = vmatpush1.msra.mxu0 0.0
    %154 = vmatprep.subr.mxu0 0.0
    %155 = vmatpush1.msra.mxu0 0.0
    %156 = vmatprep.subr.mxu0 0.0
    %157 = vmatpush1.msra.mxu0 0.0
    %158 = vmatprep.subr.mxu0 0.0
    %159 = vmatpush1.msra.mxu0 0.0
    %160 = vmatprep.subr.mxu0 0.0
    %161 = vmatpush1.msra.mxu0 0.0
    %162 = vmatprep.subr.mxu0 0.0
    %163 = vmatpush1.msra.mxu0 0.0
    %164 = vmatprep.subr.mxu0 0.0
    %165 = vmatpush1.msra.mxu0 0.0
    %166 = vmatprep.subr.mxu0 0.0
    %167 = vmatpush1.msra.mxu0 0.0
    %168 = vmatprep.subr.mxu0 0.0
    %169 = vmatpush1.msra.mxu0 0.0
    %170 = vmatprep.subr.mxu0 0.0
    %171 = vmatpush1.msra.mxu0 0.0
    %172 = vmatprep.subr.mxu0 0.0
    %173 = vmatpush1.msra.mxu0 0.0
    %174 = vmatprep.mubr.f32.mxu0 0.0
    %175 = vmatmul.mubr.f32.gmra.mrb[0].mxu0 %v26
    %v176 = vpop.f32.mrb[0].mxu0
    %v177 = vadd.f32 0.0, %v176
    %v178 = vpop.f32.mrb[0].mxu0
    %179 = vmatprep.mubr.f32.mxu0 0.0
    %180 = vmatmul.mubr.f32.gmra.mrb[0].mxu0 %v29
    %v181 = vpop.f32.mrb[0].mxu0
    %v182 = vadd.f32 0.0, %v181
    %v183 = vpop.f32.mrb[0].mxu0
    %184 = vdwg.mxu0
    %v185 = vxor.u32 %v98, 2147483648
    %v186 = vxor.u32 %v103, 2147483648
    %v187 = vmul.f32 %v185, 1.442695
    %v188 = vpow.pop %v187
    %v189 = vmul.f32 %v186, 1.442695
    %v190 = vpow.pop %v189
    %v191 = vadd.f32 %v188, 1.0
    %v192 = vadd.f32 %v190, 1.0
    %v193 = vrcp.pop %v191
    %v194 = vmul.f32 1.0, %v193
    %v195 = vrcp.pop %v192
    %v196 = vmul.f32 1.0, %v195
    %v197 = vmul.f32 %v98, %v194
    %v198 = vmul.f32 %v103, %v196
    %v199 = vmul.f32 %v197, %v177
    %v200 = vmul.f32 %v198, %v182
    %v201 = vld [vmem:[%s3] sm:$0xff]
    %v202 = vld [vmem:[%s3 + $0x8] sm:$0xff]
    %v203 = vld [vmem:[%s3 + $0x10] sm:$0xff]
    %v204 = vld [vmem:[%s3 + $0x18] sm:$0xff]
    %v205 = vld [vmem:[%s3 + $0x20] sm:$0xff]
    %v206 = vld [vmem:[%s3 + $0x28] sm:$0xff]
    %v207 = vld [vmem:[%s3 + $0x30] sm:$0xff]
    %v208 = vld [vmem:[%s3 + $0x38] sm:$0xff]
    %vm209 = vcmask 523264
    %v211 = vsel %vm209, %v199, 0
    %v214 = vsel %vm209, %v200, 0
    %216 = vmatprep.subr.mxu0 0.0
    %217 = vmatpush1.msra.mxu0 %v201
    %218 = vmatprep.subr.mxu0 0.0
    %219 = vmatpush1.msra.mxu0 %v202
    %220 = vmatprep.subr.mxu0 0.0
    %221 = vmatpush1.msra.mxu0 %v203
    %222 = vmatprep.subr.mxu0 0.0
    %223 = vmatpush1.msra.mxu0 %v204
    %224 = vmatprep.subr.mxu0 0.0
    %225 = vmatpush1.msra.mxu0 %v205
    %226 = vmatprep.subr.mxu0 0.0
    %227 = vmatpush1.msra.mxu0 %v206
    %228 = vmatprep.subr.mxu0 0.0
    %229 = vmatpush1.msra.mxu0 %v207
    %230 = vmatprep.subr.mxu0 0.0
    %231 = vmatpush1.msra.mxu0 %v208
    %232 = vmatprep.subr.mxu0 0.0
    %233 = vmatpush1.msra.mxu0 0.0
    %234 = vmatprep.subr.mxu0 0.0
    %235 = vmatpush1.msra.mxu0 0.0
    %236 = vmatprep.subr.mxu0 0.0
    %237 = vmatpush1.msra.mxu0 0.0
    %238 = vmatprep.subr.mxu0 0.0
    %239 = vmatpush1.msra.mxu0 0.0
    %240 = vmatprep.subr.mxu0 0.0
    %241 = vmatpush1.msra.mxu0 0.0
    %242 = vmatprep.subr.mxu0 0.0
    %243 = vmatpush1.msra.mxu0 0.0
    %244 = vmatprep.subr.mxu0 0.0
    %245 = vmatpush1.msra.mxu0 0.0
    %246 = vmatprep.subr.mxu0 0.0
    %247 = vmatpush1.msra.mxu0 0.0
    %248 = vmatprep.subr.mxu0 0.0
    %249 = vmatpush1.msra.mxu0 0.0
    %250 = vmatprep.subr.mxu0 0.0
    %251 = vmatpush1.msra.mxu0 0.0
    %252 = vmatprep.subr.mxu0 0.0
    %253 = vmatpush1.msra.mxu0 0.0
    %254 = vmatprep.subr.mxu0 0.0
    %255 = vmatpush1.msra.mxu0 0.0
    %256 = vmatprep.subr.mxu0 0.0
    %257 = vmatpush1.msra.mxu0 0.0
    %258 = vmatprep.subr.mxu0 0.0
    %259 = vmatpush1.msra.mxu0 0.0
    %260 = vmatprep.subr.mxu0 0.0
    %261 = vmatpush1.msra.mxu0 0.0
    %262 = vmatprep.subr.mxu0 0.0
    %263 = vmatpush1.msra.mxu0 0.0
    %264 = vmatprep.subr.mxu0 0.0
    %265 = vmatpush1.msra.mxu0 0.0
    %266 = vmatprep.subr.mxu0 0.0
    %267 = vmatpush1.msra.mxu0 0.0
    %268 = vmatprep.subr.mxu0 0.0
    %269 = vmatpush1.msra.mxu0 0.0
    %270 = vmatprep.subr.mxu0 0.0
    %271 = vmatpush1.msra.mxu0 0.0
    %272 = vmatprep.subr.mxu0 0.0
    %273 = vmatpush1.msra.mxu0 0.0
    %274 = vmatprep.subr.mxu0 0.0
    %275 = vmatpush1.msra.mxu0 0.0
    %276 = vmatprep.subr.mxu0 0.0
    %277 = vmatpush1.msra.mxu0 0.0
    %278 = vmatprep.subr.mxu0 0.0
    %279 = vmatpush1.msra.mxu0 0.0
    %280 = vmatprep.mubr.f32.mxu0 0.0
    %281 = vmatmul.mubr.f32.gmra.mrb[0].mxu0 %v211
    %v282 = vpop.f32.mrb[0].mxu0
    %v283 = vadd.f32 0.0, %v282
    %v284 = vpop.f32.mrb[0].mxu0
    %285 = vmatprep.mubr.f32.mxu0 0.0
    %286 = vmatmul.mubr.f32.gmra.mrb[0].mxu0 %v214
    %v287 = vpop.f32.mrb[0].mxu0
    %v288 = vadd.f32 0.0, %v287
    %v289 = vpop.f32.mrb[0].mxu0
    %290 = vdwg.mxu0
    %291 = vst.msk [vmem:[#allocation2] sm:$0xff] %vm24, %v283
    %292 = vst.msk [vmem:[#allocation2 + $0x8] sm:$0xff] %vm24, %v288
    // Predicated region
    $region18: #{tpu_custom_call.1} parent=1 // pred_check
      _
    $region19: #{tpu_custom_call.1} parent=1 // pred_check_branch
      %294 = sbr.rel (0) target = $region21
    $region20: #{tpu_custom_call.1} parent=1 // pred_region
      %s296 = ssub.s32 256, 256
      %297 = vsyncadd [#allocation3], %s296
      %s298 = sshll.u32 [#allocation2], 4
      %s299 = int_to_ptr.vmem [resolvable:$true] %s298
      %304 = dma.vmem_to_hbm [thread:$0]  %s299, 256, %s4, [#allocation3], 128, 128, 8
    $region21: #{tpu_custom_call.1} parent=1 // pred_fallthru
      _
    // Predicated region
    $region22: #{tpu_custom_call.1} parent=1 // pred_check
      _
    $region23: #{tpu_custom_call.1} parent=1 // pred_check_branch
      %306 = sbr.rel (0) target = $region25
    $region24: #{tpu_custom_call.1} parent=1 // pred_region
      %307 = dma.done [#allocation3], 256
    $region25: #{tpu_custom_call.1} parent=1 // pred_fallthru
      _
    %308 = vsyncpa [#allocation3], 1

</llo_original>
